<compile_context>
chip_gen: v5e
topology: v5e:2x2
jax: 0.10.0
libtpu: 0.0.40
codegen_flags: <defaults>
</compile_context>

<pallas_src>
import functools

import jax
import jax.numpy as jnp
import numpy as np
from jax import lax
from jax.experimental import pallas as pl
from jax.experimental.pallas import tpu as pltpu


def _round_up(x, m):
    return ((x + m - 1) // m) * m


def _vmem_capacity_bytes():
    """Per-core VMEM capacity (generation-aware), with a conservative fallback."""
    try:
        cap = int(getattr(pltpu.get_tpu_info(), "vmem_capacity_bytes", 0))
        if cap > 0:
            return cap
    except Exception:
        pass
    return 64 * 1024 * 1024  # v7x per-TC size: safe lower bound for v5e/v6e too


def _sublane(itemsize):
    # Native sublane granule: 8 rows for 4-byte, 16 for 2-byte, 32 for 1-byte dtypes.
    return max(8, 32 // int(itemsize))


def _fit_tiles(Mr, Kr, Nr, itemsize, sub, budget, tm_cap, tk_cap, tn_cap):
    """Pick (TM, TK, TN) so the double-buffered working set fits the VMEM budget."""
    TM = min(_round_up(Mr, sub), tm_cap)
    TK = min(_round_up(Kr, 128), tk_cap)
    TN = min(_round_up(Nr, 128), tn_cap)

    def ws(tm, tk, tn):
        # double-buffered a/b/out blocks + f32 accumulator
        return 2 * (tm * tk + tk * tn + tm * tn) * itemsize + tm * tn * 4

    while ws(TM, TK, TN) > budget and TK > 128:
        TK = max(128, _round_up(TK // 2, 128))
    while ws(TM, TK, TN) > budget and TN > 128:
        TN = max(128, _round_up(TN // 2, 128))
    while ws(TM, TK, TN) > budget and TM > sub:
        TM = max(sub, _round_up(TM // 2, sub))
    return TM, TK, TN


# -----------------------------------------------------------------------------
# Kernels
# -----------------------------------------------------------------------------
def _mm2d_kernel(a_ref, b_ref, o_ref, acc_ref, *, transpose_b):
    """2-D (shared-b) tile: (TM, TK) x (TK, TN) accumulated over the K grid axis."""
    k = pl.program_id(2)

    @pl.when(k == 0)
    def _():
        acc_ref[...] = jnp.zeros_like(acc_ref)

    if transpose_b:
        dims = (((1,), (1,)), ((), ()))   # NT: contract K with K
    else:
        dims = (((1,), (0,)), ((), ()))   # NN
    acc_ref[...] += lax.dot_general(a_ref[...], b_ref[...], dims,
                                    preferred_element_type=jnp.float32)

    @pl.when(k == pl.num_programs(2) - 1)
    def _():
        o_ref[...] = acc_ref[...].astype(o_ref.dtype)


def _mm_batched_kernel(a_ref, b_ref, o_ref, acc_ref, *, transpose_b):
    """Batched tile: (TB, TM, TK) x (TB, TK/TN, TN/TK) accumulated over K."""
    k = pl.program_id(3)

    @pl.when(k == 0)
    def _():
        acc_ref[...] = jnp.zeros_like(acc_ref)

    if transpose_b:
        dims = (((2,), (2,)), ((0,), (0,)))   # NT, batch on dim 0
    else:
        dims = (((2,), (1,)), ((0,), (0,)))   # NN, batch on dim 0
    acc_ref[...] += lax.dot_general(a_ref[...], b_ref[...], dims,
                                    preferred_element_type=jnp.float32)

    @pl.when(k == pl.num_programs(3) - 1)
    def _():
        o_ref[...] = acc_ref[...].astype(o_ref.dtype)


# -----------------------------------------------------------------------------
# Paths
# -----------------------------------------------------------------------------
def _matmul_shared(a2, b2, transpose_b, out_dtype, itemsize, sub, budget, vmem_limit):
    """Shared (unbatched) b: a2 is (M', K) with all batch dims folded into M'."""
    Mr, K = a2.shape
    N = b2.shape[0] if transpose_b else b2.shape[1]

    TM, TK, TN = _fit_tiles(Mr, K, N, itemsize, sub, budget,
                            tm_cap=512, tk_cap=2048, tn_cap=512)
    Mp, Kp, Np = _round_up(Mr, TM), _round_up(K, TK), _round_up(N, TN)

    if (Mp, Kp) != a2.shape:
        a2 = jnp.pad(a2, ((0, Mp - Mr), (0, Kp - K)))
    if transpose_b:
        if (Np, Kp) != b2.shape:
            b2 = jnp.pad(b2, ((0, Np - N), (0, Kp - K)))
        b_spec = pl.BlockSpec((TN, TK), lambda i, j, k: (j, k))
    else:
        if (Kp, Np) != b2.shape:
            b2 = jnp.pad(b2, ((0, Kp - K), (0, Np - N)))
        b_spec = pl.BlockSpec((TK, TN), lambda i, j, k: (k, j))

    grid = (Mp // TM, Np // TN, Kp // TK)
    cost = pl.CostEstimate(flops=2 * Mr * N * K, transcendentals=0,
                           bytes_accessed=(Mr * K + K * N + Mr * N) * itemsize)

    out = pl.pallas_call(
        functools.partial(_mm2d_kernel, transpose_b=transpose_b),
        out_shape=jax.ShapeDtypeStruct((Mp, Np), out_dtype),
        grid_spec=pltpu.PrefetchScalarGridSpec(
            num_scalar_prefetch=0,
            grid=grid,
            in_specs=[pl.BlockSpec((TM, TK), lambda i, j, k: (i, k)), b_spec],
            out_specs=pl.BlockSpec((TM, TN), lambda i, j, k: (i, j)),
            scratch_shapes=[pltpu.VMEM((TM, TN), jnp.float32)]),
        compiler_params=pltpu.CompilerParams(
            dimension_semantics=("parallel", "parallel", "arbitrary"),
            vmem_limit_bytes=vmem_limit),
        cost_estimate=cost,
    )(a2, b2)

    if (Mp, Np) != (Mr, N):
        out = out[:Mr, :N]
    return out


def _matmul_batched(af, bf, transpose_b, out_dtype, itemsize, sub,
                    budget, vmem_limit, M, K, N, B):
    """Batched b: af is (B, M, K), bf is (B, K, N) (NN) or (B, N, K) (NT)."""
    TM, TK, TN = _fit_tiles(M, K, N, itemsize, sub, budget,
                            tm_cap=256, tk_cap=1024, tn_cap=512)
    Mp, Kp, Np = _round_up(M, TM), _round_up(K, TK), _round_up(N, TN)

    per_b = 2 * (TM * TK + TK * TN + TM * TN) * itemsize + TM * TN * 4
    TB = int(max(1, min(B, 64, budget // max(per_b, 1))))
    # Megacore (v7x): keep >=2 blocks on a parallel axis so both TensorCores work.
    if Mp // TM == 1 and Np // TN == 1 and B >= 2:
        TB = min(TB, (B + 1) // 2)
    Bp = _round_up(B, TB)

    if (Bp, Mp, Kp) != af.shape:
        af = jnp.pad(af, ((0, Bp - B), (0, Mp - M), (0, Kp - K)))
    if transpose_b:
        if (Bp, Np, Kp) != bf.shape:
            bf = jnp.pad(bf, ((0, Bp - B), (0, Np - N), (0, Kp - K)))
        b_spec = pl.BlockSpec((TB, TN, TK), lambda bb, i, j, k: (bb, j, k))
    else:
        if (Bp, Kp, Np) != bf.shape:
            bf = jnp.pad(bf, ((0, Bp - B), (0, Kp - K), (0, Np - N)))
        b_spec = pl.BlockSpec((TB, TK, TN), lambda bb, i, j, k: (bb, k, j))

    grid = (Bp // TB, Mp // TM, Np // TN, Kp // TK)
    cost = pl.CostEstimate(
        flops=2 * B * M * N * K, transcendentals=0,
        bytes_accessed=(B * M * K + B * K * N + B * M * N) * itemsize)

    out = pl.pallas_call(
        functools.partial(_mm_batched_kernel, transpose_b=transpose_b),
        out_shape=jax.ShapeDtypeStruct((Bp, Mp, Np), out_dtype),
        grid_spec=pltpu.PrefetchScalarGridSpec(
            num_scalar_prefetch=0,
            grid=grid,
            in_specs=[pl.BlockSpec((TB, TM, TK), lambda bb, i, j, k: (bb, i, k)),
                      b_spec],
            out_specs=pl.BlockSpec((TB, TM, TN), lambda bb, i, j, k: (bb, i, j)),
            scratch_shapes=[pltpu.VMEM((TB, TM, TN), jnp.float32)]),
        compiler_params=pltpu.CompilerParams(
            dimension_semantics=("parallel", "parallel", "parallel", "arbitrary"),
            vmem_limit_bytes=vmem_limit),
        cost_estimate=cost,
    )(af, bf)

    if (Bp, Mp, Np) != (B, M, N):
        out = out[:B, :M, :N]
    return out


# -----------------------------------------------------------------------------
# Wrapper (MatMul2D.forward equivalent)
# -----------------------------------------------------------------------------
def matmul2d(a, b, transpose_b=False):
    """Pallas equivalent of MatMul2D(transpose_b).forward(a, b)."""
    out_dtype = jnp.result_type(a.dtype, b.dtype)
    a = a.astype(out_dtype)
    b = b.astype(out_dtype)
    # TODO(synk): integer inputs accumulate in f32 (exact only up to 2^24); the
    # torch module is used with floating-point tensors so this matches in practice.

    M, K = a.shape[-2], a.shape[-1]
    if transpose_b:
        N, Kb = b.shape[-2], b.shape[-1]
    else:
        Kb, N = b.shape[-2], b.shape[-1]
    assert K == Kb, "contraction dimension mismatch"

    a_lead = a.shape[:-2]
    b_lead = b.shape[:-2]
    lead = jnp.broadcast_shapes(a_lead, b_lead)
    B = int(np.prod(lead)) if lead else 1

    itemsize = int(jnp.dtype(out_dtype).itemsize)
    sub = _sublane(itemsize)

    vmem_cap = _vmem_capacity_bytes()
    budget = int(0.55 * vmem_cap)      # double-buffered blocks + accumulator
    vmem_limit = int(0.90 * vmem_cap)  # headroom for Mosaic internal scratch

    b_batch = int(np.prod(b_lead)) if b_lead else 1
    if b_batch == 1:
        # Shared-weight path: fold all leading dims of a into M so the MXU rows
        # are filled and b is streamed exactly once (no broadcast copies of b).
        a2 = a.reshape(B * M, K)
        b2 = b.reshape(b.shape[-2], b.shape[-1])
        out = _matmul_shared(a2, b2, transpose_b, out_dtype, itemsize, sub,
                             budget, vmem_limit)
        return out.reshape(lead + (M, N))

    # Batched b: avoid materializing broadcast copies when leading dims already match.
    if a_lead != b_lead:
        # Rare mixed-broadcast case: fall back to materializing the broadcast.
        a = jnp.broadcast_to(a, lead + (M, K))
        b = jnp.broadcast_to(b, lead + b.shape[-2:])
    af = a.reshape(B, M, K)
    bf = b.reshape(B, b.shape[-2], b.shape[-1])
    out = _matmul_batched(af, bf, transpose_b, out_dtype, itemsize, sub,
                          budget, vmem_limit, M, K, N, B)
    return out.reshape(lead + (M, N))


# -----------------------------------------------------------------------------
# Pure-JAX reference (mirrors the PyTorch forward exactly)
# -----------------------------------------------------------------------------
def matmul2d_ref(a, b, transpose_b=False):
    if transpose_b:
        return jnp.matmul(a, jnp.swapaxes(b, -2, -1))
    return jnp.matmul(a, b)


# -----------------------------------------------------------------------------
# Main
# -----------------------------------------------------------------------------
if __name__ == "__main__":
    key = jax.random.PRNGKey(0)
    k1, k2, k3, k4, k5, k6 = jax.random.split(key, 6)

    B, H, M, K, N = 2, 4, 8, 32, 16

    a = jax.random.normal(k1, (B, H, M, K), dtype=jnp.float32)

    # 1) Batched NN: (B, H, M, K) @ (B, H, K, N)
    b_nn = jax.random.normal(k2, (B, H, K, N), dtype=jnp.float32)
    out = jax.block_until_ready(matmul2d(a, b_nn, transpose_b=False))
    ref = matmul2d_ref(a, b_nn, transpose_b=False)
    np.testing.assert_allclose(np.asarray(out), np.asarray(ref), rtol=1e-5, atol=1e-5)

    # 2) Batched NT: (B, H, M, K) @ (B, H, N, K)^T
    b_nt = jax.random.normal(k3, (B, H, N, K), dtype=jnp.float32)
    out = jax.block_until_ready(matmul2d(a, b_nt, transpose_b=True))
    ref = matmul2d_ref(a, b_nt, transpose_b=True)
    np.testing.assert_allclose(np.asarray(out), np.asarray(ref), rtol=1e-5, atol=1e-5)

    # 3) Shared 2-D weight NN (batch folded into M, no broadcast copy of b)
    w = jax.random.normal(k4, (K, N), dtype=jnp.float32)
    out = jax.block_until_ready(matmul2d(a, w, transpose_b=False))
    ref = matmul2d_ref(a, w, transpose_b=False)
    np.testing.assert_allclose(np.asarray(out), np.asarray(ref), rtol=1e-5, atol=1e-5)

    # 4) Plain 2-D NT (no leading dims)
    a2 = jax.random.normal(k5, (M, K), dtype=jnp.float32)
    b2 = jax.random.normal(k6, (N, K), dtype=jnp.float32)
    out = jax.block_until_ready(matmul2d(a2, b2, transpose_b=True))
    ref = matmul2d_ref(a2, b2, transpose_b=True)
    np.testing.assert_allclose(np.asarray(out), np.asarray(ref), rtol=1e-5, atol=1e-5)

    # 5) bf16 inputs (dtype-aware sublane tiling), f32 accumulation in-kernel
    a_bf = a.astype(jnp.bfloat16)
    w_bf = w.astype(jnp.bfloat16)
    out = jax.block_until_ready(matmul2d(a_bf, w_bf, transpose_b=False))
    ref = jnp.matmul(a_bf.astype(jnp.float32),
                     w_bf.astype(jnp.float32)).astype(jnp.bfloat16)
    np.testing.assert_allclose(np.asarray(out.astype(jnp.float32)),
                               np.asarray(ref.astype(jnp.float32)),
                               rtol=2e-2, atol=2e-2)

    print("KERNEL_OK")
</pallas_src>

<mosaic_0001>
module attributes {stable_mosaic.version = 11 : i64} {
  func.func @_mm_batched_kernel(%arg0: i32, %arg1: i32, %arg2: i32, %arg3: i32, %arg4: memref<4x8x128xf32, #tpu.memory_space<vmem>>, %arg5: memref<4x128x128xf32, #tpu.memory_space<vmem>>, %arg6: memref<4x8x128xf32, #tpu.memory_space<vmem>>, %arg7: memref<4x8x128xf32, #tpu.memory_space<vmem>>) attributes {dimension_semantics = [#tpu.dimension_semantics<parallel>, #tpu.dimension_semantics<parallel>, #tpu.dimension_semantics<parallel>, #tpu.dimension_semantics<arbitrary>], iteration_bounds = array<i64: 2, 1, 1, 1>, scalar_prefetch = 0 : i64, scratch_operands = 1 : i64, tpu.core_type = #tpu.core_type<tc>, window_params = [{transform_indices = @transform_0, window_bounds = array<i64: 4, 8, 128>}, {transform_indices = @transform_1, window_bounds = array<i64: 4, 128, 128>}, {transform_indices = @transform_2, window_bounds = array<i64: 4, 8, 128>}]} {
    %c0_i32 = arith.constant 0 : i32
    %0 = arith.cmpi eq, %arg3, %c0_i32 : i32
    %1 = arith.extui %0 : i1 to i32
    %c0_i32_0 = arith.constant 0 : i32
    %2 = arith.cmpi ne, %1, %c0_i32_0 : i32
    scf.if %2 {
      %cst_14 = arith.constant 0.000000e+00 : f32
      %12 = vector.broadcast %cst_14 : f32 to vector<4x8x128xf32>
      %c0_15 = arith.constant 0 : index
      %c0_16 = arith.constant 0 : index
      %c0_17 = arith.constant 0 : index
      %13 = vector.load %arg7[%c0_15, %c0_16, %c0_17] : memref<4x8x128xf32, #tpu.memory_space<vmem>>, vector<4x8x128xf32>
      tpu.vector_store %arg7[%c0_15, %c0_16, %c0_17], %12 {strides = array<i32>} : memref<4x8x128xf32, #tpu.memory_space<vmem>>, vector<4x8x128xf32>,
    } else {
    }
    %c0 = arith.constant 0 : index
    %c0_1 = arith.constant 0 : index
    %c0_2 = arith.constant 0 : index
    %3 = vector.load %arg7[%c0, %c0_1, %c0_2] : memref<4x8x128xf32, #tpu.memory_space<vmem>>, vector<4x8x128xf32>
    %c0_3 = arith.constant 0 : index
    %c0_4 = arith.constant 0 : index
    %c0_5 = arith.constant 0 : index
    %4 = vector.load %arg4[%c0_3, %c0_4, %c0_5] : memref<4x8x128xf32, #tpu.memory_space<vmem>>, vector<4x8x128xf32>
    %c0_6 = arith.constant 0 : index
    %c0_7 = arith.constant 0 : index
    %c0_8 = arith.constant 0 : index
    %5 = vector.load %arg5[%c0_6, %c0_7, %c0_8] : memref<4x128x128xf32, #tpu.memory_space<vmem>>, vector<4x128x128xf32>
    %cst = arith.constant dense<0.000000e+00> : vector<4x8x128xf32>
    %6 = tpu.matmul %4, %5, %cst {dimension_numbers = #tpu.dot_dimension_numbers<[2], [1], [1], [2], [0, 0, 0, 1, 1, 2], [0], [0]>} : vector<4x8x128xf32>, vector<4x128x128xf32>, vector<4x8x128xf32> -> vector<4x8x128xf32>
    %7 = arith.addf %3, %6 : vector<4x8x128xf32>
    %c0_9 = arith.constant 0 : index
    %c0_10 = arith.constant 0 : index
    %c0_11 = arith.constant 0 : index
    %8 = vector.load %arg7[%c0_9, %c0_10, %c0_11] : memref<4x8x128xf32, #tpu.memory_space<vmem>>, vector<4x8x128xf32>
    tpu.vector_store %arg7[%c0_9, %c0_10, %c0_11], %7 {strides = array<i32>} : memref<4x8x128xf32, #tpu.memory_space<vmem>>, vector<4x8x128xf32>,
    %c0_i32_12 = arith.constant 0 : i32
    %9 = arith.cmpi eq, %arg3, %c0_i32_12 : i32
    %10 = arith.extui %9 : i1 to i32
    %c0_i32_13 = arith.constant 0 : i32
    %11 = arith.cmpi ne, %10, %c0_i32_13 : i32
    scf.if %11 {
      %c0_14 = arith.constant 0 : index
      %c0_15 = arith.constant 0 : index
      %c0_16 = arith.constant 0 : index
      %12 = vector.load %arg7[%c0_14, %c0_15, %c0_16] : memref<4x8x128xf32, #tpu.memory_space<vmem>>, vector<4x8x128xf32>
      %c0_17 = arith.constant 0 : index
      %c0_18 = arith.constant 0 : index
      %c0_19 = arith.constant 0 : index
      %13 = vector.load %arg6[%c0_17, %c0_18, %c0_19] : memref<4x8x128xf32, #tpu.memory_space<vmem>>, vector<4x8x128xf32>
      tpu.vector_store %arg6[%c0_17, %c0_18, %c0_19], %12 {strides = array<i32>} : memref<4x8x128xf32, #tpu.memory_space<vmem>>, vector<4x8x128xf32>,
    } else {
    }
    return
  }
  func.func @transform_0(%arg0: i32, %arg1: i32, %arg2: i32, %arg3: i32) -> (i32, i32, i32) {
    %c0_i32 = arith.constant 0 : i32
    return %arg0, %arg1, %arg3 : i32, i32, i32
  }
  func.func @transform_1(%arg0: i32, %arg1: i32, %arg2: i32, %arg3: i32) -> (i32, i32, i32) {
    %c0_i32 = arith.constant 0 : i32
    return %arg0, %arg3, %arg2 : i32, i32, i32
  }
  func.func @transform_2(%arg0: i32, %arg1: i32, %arg2: i32, %arg3: i32) -> (i32, i32, i32) {
    %c0_i32 = arith.constant 0 : i32
    return %arg0, %arg1, %arg2 : i32, i32, i32
  }
}

</mosaic_0001>

<llo_original>
// kernel: tpu_custom_call.1
$region0: #{tpu_custom_call.1}
  #allocation0 [shape = 'u32[]', space=smem, size = 0x4, offset = 0x4, fixed_abs, tag = 'smem constant byte address 0x4 - core index']
  #allocation1 [shape = 'u32[72,128]{1,0:T(1,128)}', space=vmem, size = 0x9000, scoped, tag = 'internal scratch']
  #allocation2 [shape = 'f32[4,8,128]{2,1,0:T(8,128)}', space=vmem, size = 0x4000, scoped, tag = 'scratch operand']
  %s0 = inlined_call_operand.hbm [shape: f32[8,8,128], index: 0, kind: input, shape index: {}]
  %s1 = inlined_call_operand.hbm [shape: f32[8,128,128], index: 1, kind: input, shape index: {}]
  %s2 = inlined_call_operand.hbm [shape: f32[8,8,128], index: 2, kind: output, shape index: {}]
  %s3 = sld [smem:[#allocation0]]
  $region57: #{tpu_custom_call.1} parent=0
    _
  %s5 = ssub.s32 1, %s3
  %s6 = scalar_select 0, %s5, %s3
  $region1: #{tpu_custom_call.1} parent=0
    #allocation3 [shape = 'u8[32768]{0}', space=vmem, size = 0x8000, scoped, tag = 'input window, operand 0']
    #allocation4 [shape = 's32[2]{0}', space=sflag, size = 0x8, scoped, tag = 'scoped memory for tpu_custom_call.1']
    #allocation5 [shape = 's32[2]{0}', space=sflag, size = 0x8, scoped, tag = 'scoped memory for tpu_custom_call.1']
    #allocation6 [shape = 'u8[524288]{0}', space=vmem, size = 0x80000, scoped, tag = 'input window, operand 1']
    #allocation7 [shape = 's32[2]{0}', space=sflag, size = 0x8, scoped, tag = 'scoped memory for tpu_custom_call.1']
    #allocation8 [shape = 'u8[32768]{0}', space=vmem, size = 0x8000, scoped, tag = 'output window, operand 0']
    %7 = vsyncpa [#allocation4], 0
    %s8 = scalar_lea.sflag [#allocation4], 1
    %9 = vsyncpa %s8, 0
    %10 = vsyncpa [#allocation7], 0
    %s11 = scalar_lea.sflag [#allocation7], 1
    %12 = vsyncpa %s11, 0
    %13 = vsyncpa [#allocation5], 0
    %s14 = scalar_lea.sflag [#allocation5], 1
    %15 = vsyncpa %s14, 0
    loop: start=0, step=1, limit=4
    $region2: #{tpu_custom_call.1} parent=1 // loop_pre_header
      _
    $region3: #{tpu_custom_call.1} parent=1 // loop_header
      %s17 = sphi 0, %s21
      %p18 = scmp.ge.s32.totalorder %s17, 4
      %s24 = sphi 0, %s50
      %s25 = sphi 0, %s46
      %s26 = sphi 0, %s42
      %s27 = sphi 0, %s38
      %s28 = sphi 0, %s24
      %s29 = sphi 0, %s25
      %s30 = sphi 0, %s26
      %s31 = sphi 0, %s27
      %s32 = sphi 0, %s28
      %s33 = sphi 0, %s29
      %s34 = sphi 0, %s30
      %s35 = sphi 0, %s31
      %s57 = sphi 0, %s59
      %s60 = sphi 0, %s57
      %s61 = sphi 0, %s60
      %s77 = sphi 0, %s61
      %s87 = sphi 0, %s89
      %s90 = sphi 0, %s87
      %s91 = sphi 0, %s90
      %s107 = sphi 0, %s91
      %s117 = sphi 0, %s119
      %s120 = sphi 0, %s117
      %s121 = sphi 0, %s120
      %s137 = sphi 0, %s121
    $region4: #{tpu_custom_call.1} parent=1 // loop_header_branch
      %20 = sbr.rel (%p18) target = $region8
    $region5: #{tpu_custom_call.1} parent=1 // loop_body
      %s22 = ssub.s32 %s17, 1
      %s23 = ssub.s32 %s17, 2
      %s36 = sadd.s32 1, %s27
      %p37 = scmp.ge.s32.totalorder %s36, 1
      %s38 = scalar_select %p37, 0, %s36
      %s39 = sadd.s32 1, %s26
      %s40 = scalar_select %p37, %s39, %s26
      %p41 = scmp.ge.s32.totalorder %s40, 1
      %s42 = scalar_select %p41, 0, %s40
      %s43 = sadd.s32 1, %s25
      %s44 = scalar_select %p41, %s43, %s25
      %p45 = scmp.ge.s32.totalorder %s44, 1
      %s46 = scalar_select %p45, 0, %s44
      %s47 = sadd.s32 1, %s24
      %s48 = scalar_select %p45, %s47, %s24
      %p49 = scmp.ge.s32.totalorder %s48, 2
      %s50 = scalar_select %p49, 0, %s48
      %s51 = ssub.s32 %s24, %s50
      %s52 = ssub.s32 %s25, %s46
      %s53 = sor.u32 %s51, %s52
      %s54 = ssub.s32 %s27, %s38
      %s55 = sor.u32 %s53, %s54
      %p56 = scmp.eq.s32.totalorder %s55, 0
      %s58 = sadd.s32 %s57, 1
      %s59 = scalar_select %p56, %s57, %s58
      %p62 = pneg %p56
      %p63 = scmp.eq.s32.totalorder %s17, 1
      %p64 = por %p62, %p63
      %p65 = scmp.ne.s32.totalorder %s57, %s60
      %p66 = scmp.eq.s32.totalorder %s17, 0
      %p67 = por %p65, %p66
      %p68 = scmp.ne.s32.totalorder %s57, %s60
      %p69 = scmp.eq.s32.totalorder %s22, 1
      %p70 = por %p68, %p69
      %p71 = scmp.ne.s32.totalorder %s60, %s61
      %p72 = scmp.eq.s32.totalorder %s22, 0
      %p73 = por %p71, %p72
      %p74 = scmp.ne.s32.totalorder %s60, %s61
      %p75 = scmp.eq.s32.totalorder %s23, 1
      %p76 = por %p74, %p75
      %p78 = scmp.ne.s32.totalorder %s61, %s77
      %p79 = scmp.eq.s32.totalorder %s23, 0
      %p80 = por %p78, %p79
      %s81 = ssub.s32 %s24, %s50
      %s82 = ssub.s32 %s27, %s38
      %s83 = sor.u32 %s81, %s82
      %s84 = ssub.s32 %s26, %s42
      %s85 = sor.u32 %s83, %s84
      %p86 = scmp.eq.s32.totalorder %s85, 0
      %s88 = sadd.s32 %s87, 1
      %s89 = scalar_select %p86, %s87, %s88
      %p92 = pneg %p86
      %p93 = scmp.eq.s32.totalorder %s17, 1
      %p94 = por %p92, %p93
      %p95 = scmp.ne.s32.totalorder %s87, %s90
      %p96 = scmp.eq.s32.totalorder %s17, 0
      %p97 = por %p95, %p96
      %p98 = scmp.ne.s32.totalorder %s87, %s90
      %p99 = scmp.eq.s32.totalorder %s22, 1
      %p100 = por %p98, %p99
      %p101 = scmp.ne.s32.totalorder %s90, %s91
      %p102 = scmp.eq.s32.totalorder %s22, 0
      %p103 = por %p101, %p102
      %p104 = scmp.ne.s32.totalorder %s90, %s91
      %p105 = scmp.eq.s32.totalorder %s23, 1
      %p106 = por %p104, %p105
      %p108 = scmp.ne.s32.totalorder %s91, %s107
      %p109 = scmp.eq.s32.totalorder %s23, 0
      %p110 = por %p108, %p109
      %s111 = ssub.s32 %s24, %s50
      %s112 = ssub.s32 %s25, %s46
      %s113 = sor.u32 %s111, %s112
      %s114 = ssub.s32 %s26, %s42
      %s115 = sor.u32 %s113, %s114
      %p116 = scmp.eq.s32.totalorder %s115, 0
      %s118 = sadd.s32 %s117, 1
      %s119 = scalar_select %p116, %s117, %s118
      %p122 = pneg %p116
      %p123 = scmp.eq.s32.totalorder %s17, 1
      %p124 = por %p122, %p123
      %p125 = scmp.ne.s32.totalorder %s117, %s120
      %p126 = scmp.eq.s32.totalorder %s17, 0
      %p127 = por %p125, %p126
      %p128 = scmp.ne.s32.totalorder %s117, %s120
      %p129 = scmp.eq.s32.totalorder %s22, 1
      %p130 = por %p128, %p129
      %p131 = scmp.ne.s32.totalorder %s120, %s121
      %p132 = scmp.eq.s32.totalorder %s22, 0
      %p133 = por %p131, %p132
      %p134 = scmp.ne.s32.totalorder %s120, %s121
      %p135 = scmp.eq.s32.totalorder %s23, 1
      %p136 = por %p134, %p135
      %p138 = scmp.ne.s32.totalorder %s121, %s137
      %p139 = scmp.eq.s32.totalorder %s23, 0
      %p140 = por %p138, %p139
      %p141 = scmp.le.s32.totalorder 1, %s17
      %p142 = scmp.lt.s32.totalorder %s17, 3
      %p143 = pnand %p141, %p142
      %p144 = pneg %p143
      // Predicated region
      $region9: #{tpu_custom_call.1} parent=5 // pred_check
        _
      $region10: #{tpu_custom_call.1} parent=5 // pred_check_branch
        %146 = sbr.rel (%p143) target = $region12
      $region11: #{tpu_custom_call.1} parent=5 // pred_region
        %s147 = ssub.s32 %s17, 1
      $region12: #{tpu_custom_call.1} parent=5 // pred_fallthru
        _
      %p148 = scmp.lt.s32.totalorder %s17, 2
      // Predicated region
      $region13: #{tpu_custom_call.1} parent=5 // pred_check
        %p149 = pneg %p148
      $region14: #{tpu_custom_call.1} parent=5 // pred_check_branch
        %151 = sbr.rel (%p149) target = $region16
      $region15: #{tpu_custom_call.1} parent=5 // pred_region
        // Predicated region
        $region17: #{tpu_custom_call.1} parent=15 // pred_check
          %p152 = pneg %p67
        $region18: #{tpu_custom_call.1} parent=15 // pred_check_branch
          %154 = sbr.rel (%p152) target = $region20
        $region19: #{tpu_custom_call.1} parent=15 // pred_region
          %s155 = sand.u32 %s57, 1
          %s156 = scalar_lea.sflag [#allocation4], %s155
          %s157 = sand.u32 %s57, 1
          %s158 = smul.addr %s157, 32
          %s159 = scalar_lea.vmem [#allocation3], %s158
          %s160 = smul.u32 4, %s24
          %162 = vsyncadd %s156, 0
          %s163 = sadd.s32 %s27, %s25
          %s164 = sadd.s32 %s163, %s160
          %s165 = smul.addr %s164, 8
          %s166 = scalar_lea.hbm %s0, %s165
          %s167 = sshll.u32 %s166, 4
          %s168 = int_to_ptr.hbm [resolvable:$true] %s167
          %s169 = sshll.u32 %s159, 4
          %s170 = int_to_ptr.vmem [resolvable:$true] %s169
          %175 = dma.hbm_to_vmem [thread:$0]  %s168, 512, %s170, %s156, 128, 128, 8
        $region20: #{tpu_custom_call.1} parent=15 // pred_fallthru
          _
        // Predicated region
        $region21: #{tpu_custom_call.1} parent=15 // pred_check
          %p176 = pneg %p97
        $region22: #{tpu_custom_call.1} parent=15 // pred_check_branch
          %178 = sbr.rel (%p176) target = $region24
        $region23: #{tpu_custom_call.1} parent=15 // pred_region
          %s179 = sand.u32 %s87, 1
          %s180 = scalar_lea.sflag [#allocation7], %s179
          %s181 = sand.u32 %s87, 1
          %s182 = smul.addr %s181, 512
          %s183 = scalar_lea.vmem [#allocation6], %s182
          %s184 = smul.u32 4, %s24
          %s185 = smul.u32 16, %s27
          %187 = vsyncadd %s180, 0
          %s188 = sadd.s32 %s26, %s185
          %s189 = smul.addr %s184, 16
          %s190 = sadd.s32 %s188, %s189
          %s191 = smul.addr %s190, 8
          %s192 = scalar_lea.hbm %s1, %s191
          %s193 = sshll.u32 %s192, 4
          %s194 = int_to_ptr.hbm [resolvable:$true] %s193
          %s195 = sshll.u32 %s183, 4
          %s196 = int_to_ptr.vmem [resolvable:$true] %s195
          %201 = dma.hbm_to_vmem [thread:$0]  %s194, 8192, %s196, %s180, 128, 128, 8
        $region24: #{tpu_custom_call.1} parent=15 // pred_fallthru
          _
      $region16: #{tpu_custom_call.1} parent=5 // pred_fallthru
        _
      %p202 = scmp.le.s32.totalorder 1, %s17
      %p203 = scmp.lt.s32.totalorder %s17, 3
      %p204 = pnand %p202, %p203
      %p205 = pneg %p204
      // Predicated region
      $region25: #{tpu_custom_call.1} parent=5 // pred_check
        _
      $region26: #{tpu_custom_call.1} parent=5 // pred_check_branch
        %207 = sbr.rel (%p204) target = $region28
      $region27: #{tpu_custom_call.1} parent=5 // pred_region
        %s208 = ssub.s32 %s17, 1
        %s209 = sand.u32 %s60, 1
        %s210 = scalar_lea.sflag [#allocation4], %s209
        %s211 = sand.u32 %s60, 1
        %s212 = smul.addr %s211, 32
        %s213 = scalar_lea.vmem [#allocation3], %s212
        // Predicated region
        $region29: #{tpu_custom_call.1} parent=27 // pred_check
          %p214 = pneg %p73
        $region30: #{tpu_custom_call.1} parent=27 // pred_check_branch
          %216 = sbr.rel (%p214) target = $region32
        $region31: #{tpu_custom_call.1} parent=27 // pred_region
          %218 = dma.done %s210, 512
        $region32: #{tpu_custom_call.1} parent=27 // pred_fallthru
          _
        %s219 = sand.u32 %s90, 1
        %s220 = scalar_lea.sflag [#allocation7], %s219
        %s221 = sand.u32 %s90, 1
        %s222 = smul.addr %s221, 512
        %s223 = scalar_lea.vmem [#allocation6], %s222
        // Predicated region
        $region33: #{tpu_custom_call.1} parent=27 // pred_check
          %p224 = pneg %p103
        $region34: #{tpu_custom_call.1} parent=27 // pred_check_branch
          %226 = sbr.rel (%p224) target = $region36
        $region35: #{tpu_custom_call.1} parent=27 // pred_region
          %228 = dma.done %s220, 8192
        $region36: #{tpu_custom_call.1} parent=27 // pred_fallthru
          _
        %s229 = sand.u32 %s60, 1
        %s230 = scalar_lea.sflag [#allocation4], %s229
        %s231 = sand.u32 %s60, 1
        %s232 = smul.addr %s231, 32
        %s233 = scalar_lea.vmem [#allocation3], %s232
        %p234 = pneg %p73
        %p235 = pneg %p70
        %s236 = sand.u32 %s90, 1
        %s237 = scalar_lea.sflag [#allocation7], %s236
        %s238 = sand.u32 %s90, 1
        %s239 = smul.addr %s238, 512
        %s240 = scalar_lea.vmem [#allocation6], %s239
        %p241 = pneg %p103
        %p242 = pneg %p100
        %p243 = pneg %p133
        %p244 = pneg %p130
        %s245 = sand.u32 %s120, 1
        %s246 = scalar_lea.sflag [#allocation5], %s245
        %s247 = sand.u32 %s120, 1
        %s248 = smul.addr %s247, 32
        %s249 = scalar_lea.vmem [#allocation8], %s248
        %s250 = smul.u32 4, %s28
        %s251 = smul.u32 4, %s28
        %s252 = smul.u32 16, %s31
        %s253 = smul.u32 4, %s28
        %p254 = scmp.eq.s32.totalorder %s31, 0
        // Predicated region
        $region37: #{tpu_custom_call.1} parent=27 // pred_check
          %p255 = pneg %p254
        $region38: #{tpu_custom_call.1} parent=27 // pred_check_branch
          %257 = sbr.rel (%p255) target = $region40
        $region39: #{tpu_custom_call.1} parent=27 // pred_region
          %258 = vst [vmem:[#allocation2] sm:$0xff] 0.0
          %259 = vst [vmem:[#allocation2 + $0x8] sm:$0xff] 0.0
          %260 = vst [vmem:[#allocation2 + $0x10] sm:$0xff] 0.0
          %261 = vst [vmem:[#allocation2 + $0x18] sm:$0xff] 0.0
        $region40: #{tpu_custom_call.1} parent=27 // pred_fallthru
          _
        %v262 = vld [vmem:[#allocation2] sm:$0xff]
        %v263 = vld [vmem:[#allocation2 + $0x8] sm:$0xff]
        %v264 = vld [vmem:[#allocation2 + $0x10] sm:$0xff]
        %v265 = vld [vmem:[#allocation2 + $0x18] sm:$0xff]
        %v266 = vld [vmem:[%s213] sm:$0xff]
        %v267 = vld [vmem:[%s213 + $0x8] sm:$0xff]
        %v268 = vld [vmem:[%s213 + $0x10] sm:$0xff]
        %v269 = vld [vmem:[%s213 + $0x18] sm:$0xff]
        %v270 = vld [vmem:[%s223] sm:$0xff]
        %v271 = vld [vmem:[%s223 + $0x8] sm:$0xff]
        %v272 = vld [vmem:[%s223 + $0x10] sm:$0xff]
        %v273 = vld [vmem:[%s223 + $0x18] sm:$0xff]
        %v274 = vld [vmem:[%s223 + $0x20] sm:$0xff]
        %v275 = vld [vmem:[%s223 + $0x28] sm:$0xff]
        %v276 = vld [vmem:[%s223 + $0x30] sm:$0xff]
        %v277 = vld [vmem:[%s223 + $0x38] sm:$0xff]
        %v278 = vld [vmem:[%s223 + $0x40] sm:$0xff]
        %v279 = vld [vmem:[%s223 + $0x48] sm:$0xff]
        %v280 = vld [vmem:[%s223 + $0x50] sm:$0xff]
        %v281 = vld [vmem:[%s223 + $0x58] sm:$0xff]
        %v282 = vld [vmem:[%s223 + $0x60] sm:$0xff]
        %v283 = vld [vmem:[%s223 + $0x68] sm:$0xff]
        %v284 = vld [vmem:[%s223 + $0x70] sm:$0xff]
        %v285 = vld [vmem:[%s223 + $0x78] sm:$0xff]
        %v286 = vld [vmem:[%s223 + $0x80] sm:$0xff]
        %v287 = vld [vmem:[%s223 + $0x88] sm:$0xff]
        %v288 = vld [vmem:[%s223 + $0x90] sm:$0xff]
        %v289 = vld [vmem:[%s223 + $0x98] sm:$0xff]
        %v290 = vld [vmem:[%s223 + $0xa0] sm:$0xff]
        %v291 = vld [vmem:[%s223 + $0xa8] sm:$0xff]
        %v292 = vld [vmem:[%s223 + $0xb0] sm:$0xff]
        %v293 = vld [vmem:[%s223 + $0xb8] sm:$0xff]
        %v294 = vld [vmem:[%s223 + $0xc0] sm:$0xff]
        %v295 = vld [vmem:[%s223 + $0xc8] sm:$0xff]
        %v296 = vld [vmem:[%s223 + $0xd0] sm:$0xff]
        %v297 = vld [vmem:[%s223 + $0xd8] sm:$0xff]
        %v298 = vld [vmem:[%s223 + $0xe0] sm:$0xff]
        %v299 = vld [vmem:[%s223 + $0xe8] sm:$0xff]
        %v300 = vld [vmem:[%s223 + $0xf0] sm:$0xff]
        %v301 = vld [vmem:[%s223 + $0xf8] sm:$0xff]
        %v302 = vld [vmem:[%s223 + $0x100] sm:$0xff]
        %v303 = vld [vmem:[%s223 + $0x108] sm:$0xff]
        %v304 = vld [vmem:[%s223 + $0x110] sm:$0xff]
        %v305 = vld [vmem:[%s223 + $0x118] sm:$0xff]
        %v306 = vld [vmem:[%s223 + $0x120] sm:$0xff]
        %v307 = vld [vmem:[%s223 + $0x128] sm:$0xff]
        %v308 = vld [vmem:[%s223 + $0x130] sm:$0xff]
        %v309 = vld [vmem:[%s223 + $0x138] sm:$0xff]
        %v310 = vld [vmem:[%s223 + $0x140] sm:$0xff]
        %v311 = vld [vmem:[%s223 + $0x148] sm:$0xff]
        %v312 = vld [vmem:[%s223 + $0x150] sm:$0xff]
        %v313 = vld [vmem:[%s223 + $0x158] sm:$0xff]
        %v314 = vld [vmem:[%s223 + $0x160] sm:$0xff]
        %v315 = vld [vmem:[%s223 + $0x168] sm:$0xff]
        %v316 = vld [vmem:[%s223 + $0x170] sm:$0xff]
        %v317 = vld [vmem:[%s223 + $0x178] sm:$0xff]
        %v318 = vld [vmem:[%s223 + $0x180] sm:$0xff]
        %v319 = vld [vmem:[%s223 + $0x188] sm:$0xff]
        %v320 = vld [vmem:[%s223 + $0x190] sm:$0xff]
        %v321 = vld [vmem:[%s223 + $0x198] sm:$0xff]
        %v322 = vld [vmem:[%s223 + $0x1a0] sm:$0xff]
        %v323 = vld [vmem:[%s223 + $0x1a8] sm:$0xff]
        %v324 = vld [vmem:[%s223 + $0x1b0] sm:$0xff]
        %v325 = vld [vmem:[%s223 + $0x1b8] sm:$0xff]
        %v326 = vld [vmem:[%s223 + $0x1c0] sm:$0xff]
        %v327 = vld [vmem:[%s223 + $0x1c8] sm:$0xff]
        %v328 = vld [vmem:[%s223 + $0x1d0] sm:$0xff]
        %v329 = vld [vmem:[%s223 + $0x1d8] sm:$0xff]
        %v330 = vld [vmem:[%s223 + $0x1e0] sm:$0xff]
        %v331 = vld [vmem:[%s223 + $0x1e8] sm:$0xff]
        %v332 = vld [vmem:[%s223 + $0x1f0] sm:$0xff]
        %v333 = vld [vmem:[%s223 + $0x1f8] sm:$0xff]
        %334 = vmatpush.msra.mxu0 %v285
        %335 = vmatpush.msra.mxu0 %v284
        %336 = vmatpush.msra.mxu0 %v283
        %337 = vmatpush.msra.mxu0 %v282
        %338 = vmatpush.msra.mxu0 %v281
        %339 = vmatpush.msra.mxu0 %v280
        %340 = vmatpush.msra.mxu0 %v279
        %341 = vmatpush.msra.mxu0 %v278
        %342 = vmatpush.msra.mxu0 %v277
        %343 = vmatpush.msra.mxu0 %v276
        %344 = vmatpush.msra.mxu0 %v275
        %345 = vmatpush.msra.mxu0 %v274
        %346 = vmatpush.msra.mxu0 %v273
        %347 = vmatpush.msra.mxu0 %v272
        %348 = vmatpush.msra.mxu0 %v271
        %349 = vmatpush.msra.mxu0 %v270
        %350 = vmatmul.f32.gmra.mxu0 %v266
        %v351 = vpop.f32.mrf.mxu0
        %v352 = vadd.f32 0.0, %v351
        %353 = vdwg.mxu0
        %354 = vmatpush.msra.mxu0 %v301
        %355 = vmatpush.msra.mxu0 %v300
        %356 = vmatpush.msra.mxu0 %v299
        %357 = vmatpush.msra.mxu0 %v298
        %358 = vmatpush.msra.mxu0 %v297
        %359 = vmatpush.msra.mxu0 %v296
        %360 = vmatpush.msra.mxu0 %v295
        %361 = vmatpush.msra.mxu0 %v294
        %362 = vmatpush.msra.mxu0 %v293
        %363 = vmatpush.msra.mxu0 %v292
        %364 = vmatpush.msra.mxu0 %v291
        %365 = vmatpush.msra.mxu0 %v290
        %366 = vmatpush.msra.mxu0 %v289
        %367 = vmatpush.msra.mxu0 %v288
        %368 = vmatpush.msra.mxu0 %v287
        %369 = vmatpush.msra.mxu0 %v286
        %370 = vmatmul.f32.gmra.mxu0 %v267
        %v371 = vpop.f32.mrf.mxu0
        %v372 = vadd.f32 0.0, %v371
        %373 = vdwg.mxu0
        %374 = vmatpush.msra.mxu0 %v317
        %375 = vmatpush.msra.mxu0 %v316
        %376 = vmatpush.msra.mxu0 %v315
        %377 = vmatpush.msra.mxu0 %v314
        %378 = vmatpush.msra.mxu0 %v313
        %379 = vmatpush.msra.mxu0 %v312
        %380 = vmatpush.msra.mxu0 %v311
        %381 = vmatpush.msra.mxu0 %v310
        %382 = vmatpush.msra.mxu0 %v309
        %383 = vmatpush.msra.mxu0 %v308
        %384 = vmatpush.msra.mxu0 %v307
        %385 = vmatpush.msra.mxu0 %v306
        %386 = vmatpush.msra.mxu0 %v305
        %387 = vmatpush.msra.mxu0 %v304
        %388 = vmatpush.msra.mxu0 %v303
        %389 = vmatpush.msra.mxu0 %v302
        %390 = vmatmul.f32.gmra.mxu0 %v268
        %v391 = vpop.f32.mrf.mxu0
        %v392 = vadd.f32 0.0, %v391
        %393 = vdwg.mxu0
        %394 = vmatpush.msra.mxu0 %v333
        %395 = vmatpush.msra.mxu0 %v332
        %396 = vmatpush.msra.mxu0 %v331
        %397 = vmatpush.msra.mxu0 %v330
        %398 = vmatpush.msra.mxu0 %v329
        %399 = vmatpush.msra.mxu0 %v328
        %400 = vmatpush.msra.mxu0 %v327
        %401 = vmatpush.msra.mxu0 %v326
        %402 = vmatpush.msra.mxu0 %v325
        %403 = vmatpush.msra.mxu0 %v324
        %404 = vmatpush.msra.mxu0 %v323
        %405 = vmatpush.msra.mxu0 %v322
        %406 = vmatpush.msra.mxu0 %v321
        %407 = vmatpush.msra.mxu0 %v320
        %408 = vmatpush.msra.mxu0 %v319
        %409 = vmatpush.msra.mxu0 %v318
        %410 = vmatmul.f32.gmra.mxu0 %v269
        %v411 = vpop.f32.mrf.mxu0
        %v412 = vadd.f32 0.0, %v411
        %413 = vdwg.mxu0
        %v414 = vadd.f32 %v262, %v352
        %v415 = vadd.f32 %v263, %v372
        %v416 = vadd.f32 %v264, %v392
        %v417 = vadd.f32 %v265, %v412
        %418 = vst [vmem:[#allocation2] sm:$0xff] %v414
        %419 = vst [vmem:[#allocation2 + $0x8] sm:$0xff] %v415
        %420 = vst [vmem:[#allocation2 + $0x10] sm:$0xff] %v416
        %421 = vst [vmem:[#allocation2 + $0x18] sm:$0xff] %v417
        // Predicated region
        $region41: #{tpu_custom_call.1} parent=27 // pred_check
          %p422 = pneg %p254
        $region42: #{tpu_custom_call.1} parent=27 // pred_check_branch
          %424 = sbr.rel (%p422) target = $region44
        $region43: #{tpu_custom_call.1} parent=27 // pred_region
          %v425 = vld [vmem:[#allocation2] sm:$0xff]
          %v426 = vld [vmem:[#allocation2 + $0x8] sm:$0xff]
          %v427 = vld [vmem:[#allocation2 + $0x10] sm:$0xff]
          %v428 = vld [vmem:[#allocation2 + $0x18] sm:$0xff]
          %429 = vst [vmem:[%s249] sm:$0xff] %v425
          %430 = vst [vmem:[%s249 + $0x8] sm:$0xff] %v426
          %431 = vst [vmem:[%s249 + $0x10] sm:$0xff] %v427
          %432 = vst [vmem:[%s249 + $0x18] sm:$0xff] %v428
        $region44: #{tpu_custom_call.1} parent=27 // pred_fallthru
          _
        %s433 = sand.u32 %s120, 1
        %s434 = scalar_lea.sflag [#allocation5], %s433
        %s435 = sand.u32 %s120, 1
        %s436 = smul.addr %s435, 32
        %s437 = scalar_lea.vmem [#allocation8], %s436
        // Predicated region
        $region45: #{tpu_custom_call.1} parent=27 // pred_check
          %p438 = pneg %p130
        $region46: #{tpu_custom_call.1} parent=27 // pred_check_branch
          %440 = sbr.rel (%p438) target = $region48
        $region47: #{tpu_custom_call.1} parent=27 // pred_region
          %s441 = smul.u32 4, %s28
          %443 = vsyncadd %s434, 0
          %s444 = sadd.s32 %s30, %s29
          %s445 = sadd.s32 %s444, %s441
          %s446 = smul.addr %s445, 8
          %s447 = scalar_lea.hbm %s2, %s446
          %s448 = sshll.u32 %s437, 4
          %s449 = int_to_ptr.vmem [resolvable:$true] %s448
          %s450 = sshll.u32 %s447, 4
          %s451 = int_to_ptr.hbm [resolvable:$true] %s450
          %456 = dma.vmem_to_hbm [thread:$0]  %s449, 512, %s451, %s434, 128, 128, 8
        $region48: #{tpu_custom_call.1} parent=27 // pred_fallthru
          _
      $region28: #{tpu_custom_call.1} parent=5 // pred_fallthru
        _
      %p457 = scmp.le.s32.totalorder 2, %s17
      // Predicated region
      $region49: #{tpu_custom_call.1} parent=5 // pred_check
        %p458 = pneg %p457
      $region50: #{tpu_custom_call.1} parent=5 // pred_check_branch
        %460 = sbr.rel (%p458) target = $region52
      $region51: #{tpu_custom_call.1} parent=5 // pred_region
        %s461 = ssub.s32 %s17, 2
        // Predicated region
        $region53: #{tpu_custom_call.1} parent=51 // pred_check
          %p462 = pneg %p136
        $region54: #{tpu_custom_call.1} parent=51 // pred_check_branch
          %464 = sbr.rel (%p462) target = $region56
        $region55: #{tpu_custom_call.1} parent=51 // pred_region
          %s465 = sand.u32 %s121, 1
          %s466 = scalar_lea.sflag [#allocation5], %s465
          %s467 = sand.u32 %s121, 1
          %s468 = smul.addr %s467, 32
          %s469 = scalar_lea.vmem [#allocation8], %s468
          %471 = dma.done %s466, 512
        $region56: #{tpu_custom_call.1} parent=51 // pred_fallthru
          _
      $region52: #{tpu_custom_call.1} parent=5 // pred_fallthru
        _
    $region6: #{tpu_custom_call.1} parent=1 // loop_footer
      %s21 = sadd.s32 1, %s17
    $region7: #{tpu_custom_call.1} parent=1 // loop_footer_branch
      %16 = sbr.rel target = $region3
    $region8: #{tpu_custom_call.1} parent=1 // loop_exit
      _
    %472 = vsyncpa [#allocation4], 1
    %s473 = scalar_lea.sflag [#allocation4], 1
    %474 = vsyncpa %s473, 1
    %475 = vsyncpa [#allocation7], 1
    %s476 = scalar_lea.sflag [#allocation7], 1
    %477 = vsyncpa %s476, 1
    %478 = vsyncpa [#allocation5], 1
    %s479 = scalar_lea.sflag [#allocation5], 1
    %480 = vsyncpa %s479, 1

</llo_original>
